<compile_context>
chip_gen: v7x
topology: tpu7x:2x2x1
jax: 0.10.0
libtpu: 0.0.40
codegen_flags: <defaults>
</compile_context>

<pallas_src>
import functools

import jax
import jax.numpy as jnp
from jax.experimental import pallas as pl
from jax.experimental.pallas import tpu as pltpu

_LANE = 128
_SUBLANE = 8


def _round_up(x: int, m: int) -> int:
    return ((x + m - 1) // m) * m


def _policy_kernel(n_layer, *refs):
    # refs = (x_ref, w0, b0, w1, b1, ..., w_{L-1}, b_{L-1}, out_ref)
    x_ref = refs[0]
    out_ref = refs[-1]
    params = refs[1:-1]

    h = x_ref[...]  # bf16 (tb, dim_obs)
    for layer in range(n_layer):
        w = params[2 * layer][...]        # bf16 (k, p_out)
        b = params[2 * layer + 1][...]    # f32  (1, p_out)
        h = jnp.dot(h, w, preferred_element_type=jnp.float32) + b
        if layer < n_layer - 1:
            h = jnp.maximum(h, 0.0).astype(jnp.bfloat16)  # ReLU, bf16 for next MXU op

    # Padded action lanes already hold -1e30 (baked into the last bias), so
    # exp(-1e30 - m) underflows to 0 and they never contribute to the softmax.
    m = jnp.max(h, axis=-1, keepdims=True)
    e = jnp.exp(h - m)
    out_ref[...] = e / jnp.sum(e, axis=-1, keepdims=True)


def make_policy_forward(weights, biases):
    """Pads/casts parameters once; returns a jit'ed forward(x) callable.

    weights[i]: (in_i, out_i); biases[i]: (1, out_i) or (out_i,).
    Matches PolicyNetwork.forward: MLP (ReLU between layers) -> softmax(dim=1).
    """
    n_layer = len(weights)
    assert n_layer > 0
    dim_obs = weights[0].shape[0]
    n_action = weights[-1].shape[1]

    p_out = [_round_up(w.shape[1], _LANE) for w in weights]
    # K (input) dim per layer: first layer matches the *unpadded* x; later
    # layers match the previous layer's lane-padded output width.
    k_dims = [dim_obs] + p_out[:-1]
    a_pad = p_out[-1]

    # ---- one-time host-side padding / casting (hoisted out of forward) ----
    params = []
    for li, (w, b) in enumerate(zip(weights, biases)):
        k, po = k_dims[li], p_out[li]
        w_p = jnp.zeros((k, po), jnp.bfloat16)
        w_p = w_p.at[: w.shape[0], : w.shape[1]].set(jnp.asarray(w, jnp.bfloat16))
        b_flat = jnp.reshape(jnp.asarray(b, jnp.float32), (-1,))
        if li == n_layer - 1 and po > n_action:
            # Bake the padded-action-lane mask into the last bias (finite large
            # negative, not -inf, to avoid inf-arithmetic edge cases).
            b_p = jnp.full((1, po), -1e30, jnp.float32)
        else:
            b_p = jnp.zeros((1, po), jnp.float32)
        b_p = b_p.at[0, : b_flat.shape[0]].set(b_flat)
        params += [w_p, b_p]
    params = tuple(params)

    kernel = functools.partial(_policy_kernel, n_layer)

    def forward(x):
        batch = x.shape[0]
        assert x.shape[1] == dim_obs

        # Batch tile: >= 2 grid steps once the batch is big enough to split
        # (both v7x TensorCores get work), sized to minimize ragged padding.
        if batch <= _SUBLANE:
            n_tiles = 1
        else:
            n_tiles = max(2, pl.cdiv(batch, 512))
        tb = min(512, _round_up(pl.cdiv(batch, n_tiles), _SUBLANE))
        n_tiles = pl.cdiv(batch, tb)
        b_pad = n_tiles * tb

        # Only the batch dim of x is padded; streamed as bf16 (halves DMA).
        x_p = jnp.zeros((b_pad, dim_obs), jnp.bfloat16).at[:batch].set(
            x.astype(jnp.bfloat16))

        # x lane dim == full array dim (legal block shape, no 128-lane pad).
        # Raise to pl.Buffered(3) if profiling ever shows exposed x DMA.
        in_specs = [pl.BlockSpec((tb, dim_obs), lambda i: (i, 0))]
        for k, po in zip(k_dims, p_out):
            # Constant block index -> VMEM-resident; Buffered(1) = single copy.
            in_specs.append(pl.BlockSpec((k, po), lambda i: (0, 0),
                                         pipeline_mode=pl.Buffered(1)))
            in_specs.append(pl.BlockSpec((1, po), lambda i: (0, 0),
                                         pipeline_mode=pl.Buffered(1)))

        # VMEM budget: single-buffered bf16 weights + f32 biases, double-
        # buffered x/out tiles, live activation slabs, + compiler-scratch
        # slack; clamped to physical capacity minus headroom (v7x = 64 MiB).
        weight_bytes = sum(k * po * 2 + po * 4 for k, po in zip(k_dims, p_out))
        io_bytes = 2 * tb * (dim_obs * 2 + a_pad * 4)
        act_bytes = 3 * tb * max(p_out) * 4
        need = weight_bytes + io_bytes + act_bytes + (4 << 20)
        try:
            vmem_cap = int(getattr(pltpu.get_tpu_info(), "vmem_capacity_bytes",
                                   64 << 20))
        except Exception:
            vmem_cap = 64 << 20  # fall back to the tightest (v7x) budget
        ceiling = max(vmem_cap - (16 << 20), 32 << 20)
        vmem_limit = int(min(max(need, 16 << 20), ceiling))

        out_p = pl.pallas_call(
            kernel,
            out_shape=jax.ShapeDtypeStruct((b_pad, a_pad), jnp.float32),
            grid=(n_tiles,),
            in_specs=in_specs,
            out_specs=pl.BlockSpec((tb, a_pad), lambda i: (i, 0)),
            compiler_params=pltpu.CompilerParams(
                dimension_semantics=("parallel",),
                vmem_limit_bytes=vmem_limit,
            ),
        )(x_p, *params)

        # Slice back to the unpadded logical shape.
        return out_p[:batch, :n_action]

    return jax.jit(forward)


def init_params(key, dim_observation, n_action, hidden_dim, n_layer):
    """Deterministic synthetic parameters matching PolicyNetwork.__init__ shapes."""
    assert n_layer > 0
    if n_layer == 1:
        dims = [(dim_observation, n_action)]
    else:
        dims = [(dim_observation, hidden_dim)]
        for _ in range(n_layer - 2):
            dims.append((hidden_dim, hidden_dim))
        dims.append((hidden_dim, n_action))

    weights, biases = [], []
    for (d_in, d_out) in dims:
        key, kw, kb = jax.random.split(key, 3)
        scale = 1.0 / jnp.sqrt(jnp.float32(d_in))
        weights.append(jax.random.uniform(kw, (d_in, d_out), jnp.float32, -scale, scale))
        biases.append(jax.random.uniform(kb, (1, d_out), jnp.float32, -scale, scale))
    return weights, biases


if __name__ == "__main__":
    # Small shapes consistent with the module's forward.
    batch = 8
    dim_observation = 16
    n_action = 8
    hidden_dim = 32
    n_layer = 3

    key = jax.random.PRNGKey(0)
    key, kx = jax.random.split(key)
    x = jax.random.normal(kx, (batch, dim_observation), jnp.float32)

    weights, biases = init_params(key, dim_observation, n_action, hidden_dim, n_layer)

    forward = make_policy_forward(weights, biases)
    out = jax.block_until_ready(forward(x))

    # Pure-JAX f32 reference (tolerances account for the bf16 MXU matmuls).
    h = x
    for i, (w, b) in enumerate(zip(weights, biases)):
        h = h @ w + b
        if i < n_layer - 1:
            h = jnp.maximum(h, 0.0)
    ref = jax.nn.softmax(h, axis=-1)

    assert out.shape == (batch, n_action)
    assert jnp.allclose(out, ref, atol=1e-2, rtol=1e-2), "mismatch vs reference"
    assert jnp.allclose(jnp.sum(out, axis=-1), 1.0, atol=1e-3), "rows must sum to 1"

    print("KERNEL_OK")
</pallas_src>

<mosaic_0001>
module attributes {stable_mosaic.version = 11 : i64} {
  func.func @_policy_kernel(%arg0: i32, %arg1: memref<8x16xbf16, #tpu.memory_space<vmem>>, %arg2: memref<16x128xbf16, #tpu.memory_space<vmem>>, %arg3: memref<1x128xf32, #tpu.memory_space<vmem>>, %arg4: memref<128x128xbf16, #tpu.memory_space<vmem>>, %arg5: memref<1x128xf32, #tpu.memory_space<vmem>>, %arg6: memref<128x128xbf16, #tpu.memory_space<vmem>>, %arg7: memref<1x128xf32, #tpu.memory_space<vmem>>, %arg8: memref<8x128xf32, #tpu.memory_space<vmem>>) attributes {dimension_semantics = [#tpu.dimension_semantics<parallel>], iteration_bounds = array<i64: 1>, scalar_prefetch = 0 : i64, scratch_operands = 0 : i64, tpu.core_type = #tpu.core_type<tc>, window_params = [{transform_indices = @transform_0, window_bounds = array<i64: 8, 16>}, {pipeline_mode = #tpu.pipeline_mode<synchronous>, transform_indices = @transform_1, window_bounds = array<i64: 16, 128>}, {pipeline_mode = #tpu.pipeline_mode<synchronous>, transform_indices = @transform_2, window_bounds = array<i64: 1, 128>}, {pipeline_mode = #tpu.pipeline_mode<synchronous>, transform_indices = @transform_3, window_bounds = array<i64: 128, 128>}, {pipeline_mode = #tpu.pipeline_mode<synchronous>, transform_indices = @transform_4, window_bounds = array<i64: 1, 128>}, {pipeline_mode = #tpu.pipeline_mode<synchronous>, transform_indices = @transform_5, window_bounds = array<i64: 128, 128>}, {pipeline_mode = #tpu.pipeline_mode<synchronous>, transform_indices = @transform_6, window_bounds = array<i64: 1, 128>}, {transform_indices = @transform_7, window_bounds = array<i64: 8, 128>}]} {
    %c0 = arith.constant 0 : index
    %c0_0 = arith.constant 0 : index
    %0 = vector.load %arg1[%c0, %c0_0] : memref<8x16xbf16, #tpu.memory_space<vmem>>, vector<8x16xbf16>
    %c0_1 = arith.constant 0 : index
    %c0_2 = arith.constant 0 : index
    %1 = vector.load %arg2[%c0_1, %c0_2] : memref<16x128xbf16, #tpu.memory_space<vmem>>, vector<16x128xbf16>
    %c0_3 = arith.constant 0 : index
    %c0_4 = arith.constant 0 : index
    %2 = vector.load %arg3[%c0_3, %c0_4] : memref<1x128xf32, #tpu.memory_space<vmem>>, vector<1x128xf32>
    %cst = arith.constant dense<0.000000e+00> : vector<8x128xf32>
    %3 = tpu.matmul %0, %1, %cst {dimension_numbers = #tpu.dot_dimension_numbers<[1], [0], [0], [1], [0, 0, 1, 1], [], []>} : vector<8x16xbf16>, vector<16x128xbf16>, vector<8x128xf32> -> vector<8x128xf32>
    %4 = vector.broadcast %2 : vector<1x128xf32> to vector<8x128xf32>
    %5 = arith.addf %3, %4 : vector<8x128xf32>
    %cst_5 = arith.constant 0.000000e+00 : f32
    %6 = vector.broadcast %cst_5 : f32 to vector<8x128xf32>
    %7 = arith.maximumf %5, %6 : vector<8x128xf32>
    %8 = arith.truncf %7 : vector<8x128xf32> to vector<8x128xbf16>
    %c0_6 = arith.constant 0 : index
    %c0_7 = arith.constant 0 : index
    %9 = vector.load %arg4[%c0_6, %c0_7] : memref<128x128xbf16, #tpu.memory_space<vmem>>, vector<128x128xbf16>
    %c0_8 = arith.constant 0 : index
    %c0_9 = arith.constant 0 : index
    %10 = vector.load %arg5[%c0_8, %c0_9] : memref<1x128xf32, #tpu.memory_space<vmem>>, vector<1x128xf32>
    %cst_10 = arith.constant dense<0.000000e+00> : vector<8x128xf32>
    %11 = tpu.matmul %8, %9, %cst_10 {dimension_numbers = #tpu.dot_dimension_numbers<[1], [0], [0], [1], [0, 0, 1, 1], [], []>} : vector<8x128xbf16>, vector<128x128xbf16>, vector<8x128xf32> -> vector<8x128xf32>
    %12 = vector.broadcast %10 : vector<1x128xf32> to vector<8x128xf32>
    %13 = arith.addf %11, %12 : vector<8x128xf32>
    %cst_11 = arith.constant 0.000000e+00 : f32
    %14 = vector.broadcast %cst_11 : f32 to vector<8x128xf32>
    %15 = arith.maximumf %13, %14 : vector<8x128xf32>
    %16 = arith.truncf %15 : vector<8x128xf32> to vector<8x128xbf16>
    %c0_12 = arith.constant 0 : index
    %c0_13 = arith.constant 0 : index
    %17 = vector.load %arg6[%c0_12, %c0_13] : memref<128x128xbf16, #tpu.memory_space<vmem>>, vector<128x128xbf16>
    %c0_14 = arith.constant 0 : index
    %c0_15 = arith.constant 0 : index
    %18 = vector.load %arg7[%c0_14, %c0_15] : memref<1x128xf32, #tpu.memory_space<vmem>>, vector<1x128xf32>
    %cst_16 = arith.constant dense<0.000000e+00> : vector<8x128xf32>
    %19 = tpu.matmul %16, %17, %cst_16 {dimension_numbers = #tpu.dot_dimension_numbers<[1], [0], [0], [1], [0, 0, 1, 1], [], []>} : vector<8x128xbf16>, vector<128x128xbf16>, vector<8x128xf32> -> vector<8x128xf32>
    %20 = vector.broadcast %18 : vector<1x128xf32> to vector<8x128xf32>
    %21 = arith.addf %19, %20 : vector<8x128xf32>
    %cst_17 = arith.constant dense<0xFF800000> : vector<8xf32>
    %22 = vector.multi_reduction <maximumf>, %21, %cst_17 [1] : vector<8x128xf32> to vector<8xf32>
    %23 = vector.shape_cast %22 : vector<8xf32> to vector<8x1xf32>
    %24 = vector.broadcast %23 : vector<8x1xf32> to vector<8x128xf32>
    %25 = arith.subf %21, %24 : vector<8x128xf32>
    %26 = math.exp %25 : vector<8x128xf32>
    %cst_18 = arith.constant dense<0.000000e+00> : vector<8xf32>
    %27 = vector.multi_reduction <add>, %26, %cst_18 [1] : vector<8x128xf32> to vector<8xf32>
    %28 = vector.shape_cast %27 : vector<8xf32> to vector<8x1xf32>
    %29 = vector.broadcast %28 : vector<8x1xf32> to vector<8x128xf32>
    %30 = arith.divf %26, %29 : vector<8x128xf32>
    %c0_19 = arith.constant 0 : index
    %c0_20 = arith.constant 0 : index
    %31 = vector.load %arg8[%c0_19, %c0_20] : memref<8x128xf32, #tpu.memory_space<vmem>>, vector<8x128xf32>
    tpu.vector_store %arg8[%c0_19, %c0_20], %30 {strides = array<i32>} : memref<8x128xf32, #tpu.memory_space<vmem>>, vector<8x128xf32>,
    return
  }
  func.func @transform_0(%arg0: i32) -> (i32, i32) {
    %c0_i32 = arith.constant 0 : i32
    %c0_i32_0 = arith.constant 0 : i32
    return %arg0, %c0_i32 : i32, i32
  }
  func.func @transform_1(%arg0: i32) -> (i32, i32) {
    %c0_i32 = arith.constant 0 : i32
    %c0_i32_0 = arith.constant 0 : i32
    %c0_i32_1 = arith.constant 0 : i32
    return %c0_i32, %c0_i32_0 : i32, i32
  }
  func.func @transform_2(%arg0: i32) -> (i32, i32) {
    %c0_i32 = arith.constant 0 : i32
    %c0_i32_0 = arith.constant 0 : i32
    %c0_i32_1 = arith.constant 0 : i32
    return %c0_i32, %c0_i32_0 : i32, i32
  }
  func.func @transform_3(%arg0: i32) -> (i32, i32) {
    %c0_i32 = arith.constant 0 : i32
    %c0_i32_0 = arith.constant 0 : i32
    %c0_i32_1 = arith.constant 0 : i32
    return %c0_i32, %c0_i32_0 : i32, i32
  }
  func.func @transform_4(%arg0: i32) -> (i32, i32) {
    %c0_i32 = arith.constant 0 : i32
    %c0_i32_0 = arith.constant 0 : i32
    %c0_i32_1 = arith.constant 0 : i32
    return %c0_i32, %c0_i32_0 : i32, i32
  }
  func.func @transform_5(%arg0: i32) -> (i32, i32) {
    %c0_i32 = arith.constant 0 : i32
    %c0_i32_0 = arith.constant 0 : i32
    %c0_i32_1 = arith.constant 0 : i32
    return %c0_i32, %c0_i32_0 : i32, i32
  }
  func.func @transform_6(%arg0: i32) -> (i32, i32) {
    %c0_i32 = arith.constant 0 : i32
    %c0_i32_0 = arith.constant 0 : i32
    %c0_i32_1 = arith.constant 0 : i32
    return %c0_i32, %c0_i32_0 : i32, i32
  }
  func.func @transform_7(%arg0: i32) -> (i32, i32) {
    %c0_i32 = arith.constant 0 : i32
    %c0_i32_0 = arith.constant 0 : i32
    return %arg0, %c0_i32 : i32, i32
  }
}

</mosaic_0001>

<llo_original>
// kernel: forward.1
$region0: #{forward.1}
  #allocation0 [shape = 'u32[]', space=smem, size = 0x4, offset = 0x4, fixed_abs, tag = 'smem constant byte address 0x4 - core index']
  #allocation1 [shape = 'u32[144,128]{1,0:T(1,128)}', space=vmem, size = 0x12000, scoped, tag = 'internal scratch']
  %s0 = inlined_call_operand.vmem [shape: bf16[8,16], index: 0, kind: input, shape index: {}]
  %s1 = inlined_call_operand.vmem [shape: bf16[16,128], index: 1, kind: input, shape index: {}]
  %s2 = inlined_call_operand.vmem [shape: f32[1,128], index: 2, kind: input, shape index: {}]
  %s3 = inlined_call_operand.hbm [shape: bf16[128,128], index: 3, kind: input, shape index: {}]
  %s4 = inlined_call_operand.vmem [shape: f32[1,128], index: 4, kind: input, shape index: {}]
  %s5 = inlined_call_operand.hbm [shape: bf16[128,128], index: 5, kind: input, shape index: {}]
  %s6 = inlined_call_operand.vmem [shape: f32[1,128], index: 6, kind: input, shape index: {}]
  %s7 = inlined_call_operand.hbm [shape: f32[8,128], index: 7, kind: output, shape index: {}]
  %s8 = sld [smem:[#allocation0]]
  $region46: #{forward.1} parent=0
    _
  %s10 = ssub.s32 1, %s8
  %s11 = scalar_select 0, %s10, %s8
  $region1: #{forward.1} parent=0
    #allocation2 [shape = 'u8[32768]{0}', space=vmem, size = 0x8000, scoped, tag = 'input window, operand 3, single buffered']
    #allocation3 [shape = 's32[1]{0}', space=sflag, size = 0x4, scoped, tag = 'scoped memory for forward.1']
    #allocation4 [shape = 's32[1]{0}', space=sflag, size = 0x4, scoped, tag = 'scoped memory for forward.1']
    #allocation5 [shape = 'u8[32768]{0}', space=vmem, size = 0x8000, scoped, tag = 'input window, operand 5, single buffered']
    #allocation6 [shape = 's32[1]{0}', space=sflag, size = 0x4, scoped, tag = 'scoped memory for forward.1']
    #allocation7 [shape = 'u8[4096]{0}', space=vmem, size = 0x1000, scoped, tag = 'output window, operand 0, single buffered']
    %12 = vsyncpa [#allocation3], 0
    %13 = vsyncpa [#allocation6], 0
    %14 = vsyncpa [#allocation4], 0
    // Predicated region
    $region2: #{forward.1} parent=1 // pred_check
      _
    $region3: #{forward.1} parent=1 // pred_check_branch
      %16 = sbr.rel (0) target = $region5
    $region4: #{forward.1} parent=1 // pred_region
      _
    $region5: #{forward.1} parent=1 // pred_fallthru
      _
    // Predicated region
    $region6: #{forward.1} parent=1 // pred_check
      _
    $region7: #{forward.1} parent=1 // pred_check_branch
      %18 = sbr.rel (0) target = $region9
    $region8: #{forward.1} parent=1 // pred_region
      _
    $region9: #{forward.1} parent=1 // pred_fallthru
      _
    // Predicated region
    $region10: #{forward.1} parent=1 // pred_check
      _
    $region11: #{forward.1} parent=1 // pred_check_branch
      %20 = sbr.rel (0) target = $region13
    $region12: #{forward.1} parent=1 // pred_region
      _
    $region13: #{forward.1} parent=1 // pred_fallthru
      _
    // Predicated region
    $region14: #{forward.1} parent=1 // pred_check
      _
    $region15: #{forward.1} parent=1 // pred_check_branch
      %22 = sbr.rel (0) target = $region17
    $region16: #{forward.1} parent=1 // pred_region
      %s24 = ssub.s32 1024, 1024
      %25 = vsyncadd [#allocation3], %s24
      %s26 = sshll.u32 [#allocation2], 4
      %s27 = int_to_ptr.vmem [resolvable:$true] %s26
      %32 = dma.hbm_to_vmem [thread:$0]  %s3, 1024, %s27, [#allocation3], 64, 64, 4
    $region17: #{forward.1} parent=1 // pred_fallthru
      _
    // Predicated region
    $region18: #{forward.1} parent=1 // pred_check
      _
    $region19: #{forward.1} parent=1 // pred_check_branch
      %34 = sbr.rel (0) target = $region21
    $region20: #{forward.1} parent=1 // pred_region
      _
    $region21: #{forward.1} parent=1 // pred_fallthru
      _
    // Predicated region
    $region22: #{forward.1} parent=1 // pred_check
      _
    $region23: #{forward.1} parent=1 // pred_check_branch
      %36 = sbr.rel (0) target = $region25
    $region24: #{forward.1} parent=1 // pred_region
      %s38 = ssub.s32 1024, 1024
      %39 = vsyncadd [#allocation6], %s38
      %s40 = sshll.u32 [#allocation5], 4
      %s41 = int_to_ptr.vmem [resolvable:$true] %s40
      %46 = dma.hbm_to_vmem [thread:$0]  %s5, 1024, %s41, [#allocation6], 64, 64, 4
    $region25: #{forward.1} parent=1 // pred_fallthru
      _
    // Predicated region
    $region26: #{forward.1} parent=1 // pred_check
      _
    $region27: #{forward.1} parent=1 // pred_check_branch
      %48 = sbr.rel (0) target = $region29
    $region28: #{forward.1} parent=1 // pred_region
      _
    $region29: #{forward.1} parent=1 // pred_fallthru
      _
    // Predicated region
    $region30: #{forward.1} parent=1 // pred_check
      _
    $region31: #{forward.1} parent=1 // pred_check_branch
      %50 = sbr.rel (0) target = $region33
    $region32: #{forward.1} parent=1 // pred_region
      %51 = dma.done [#allocation3], 1024
    $region33: #{forward.1} parent=1 // pred_fallthru
      _
    // Predicated region
    $region34: #{forward.1} parent=1 // pred_check
      _
    $region35: #{forward.1} parent=1 // pred_check_branch
      %53 = sbr.rel (0) target = $region37
    $region36: #{forward.1} parent=1 // pred_region
      %54 = dma.done [#allocation6], 1024
    $region37: #{forward.1} parent=1 // pred_fallthru
      _
    %v56 = vld [vmem:[%s0] sm:$0xf]
    %v57 = vld [vmem:[%s1] sm:$0xf]
    %v58 = vld [vmem:[%s1 + $0x4] sm:$0xf]
    %v59 = vld [vmem:[%s2] sm:$0x1]
    %v61 = vlaneseq
    %v62 = vshrl.u32 %v61, 7
    %v63 = vsub.s32 0, %v62
    %v64 = vrot.slane %v59, %v63
    %v68 = vunpack.c.l.b16 %v57
    %v69 = vunpack.c.l.b16 %v58
    %v70 = vpack.c.b16 %v69, %v68
    %vm72 = vcmask 130048
    %v74 = vsel %vm72, %v56, 0
    %76 = vmatprep.subr.bf16.mxu0 0
    %77 = vmatpush1.bf16.msra.mxu0 %v70
    %78 = vmatprep.subr.bf16.mxu0 0
    %79 = vmatpush1.bf16.msra.mxu0 0
    %80 = vmatprep.subr.bf16.mxu0 0
    %81 = vmatpush1.bf16.msra.mxu0 0
    %82 = vmatprep.subr.bf16.mxu0 0
    %83 = vmatpush1.bf16.msra.mxu0 0
    %84 = vmatprep.subr.bf16.mxu0 0
    %85 = vmatpush1.bf16.msra.mxu0 0
    %86 = vmatprep.subr.bf16.mxu0 0
    %87 = vmatpush1.bf16.msra.mxu0 0
    %88 = vmatprep.subr.bf16.mxu0 0
    %89 = vmatpush1.bf16.msra.mxu0 0
    %90 = vmatprep.subr.bf16.mxu0 0
    %91 = vmatpush1.bf16.msra.mxu0 0
    %92 = vmatprep.subr.bf16.mxu0 0
    %93 = vmatpush1.bf16.msra.mxu0 0
    %94 = vmatprep.subr.bf16.mxu0 0
    %95 = vmatpush1.bf16.msra.mxu0 0
    %96 = vmatprep.subr.bf16.mxu0 0
    %97 = vmatpush1.bf16.msra.mxu0 0
    %98 = vmatprep.subr.bf16.mxu0 0
    %99 = vmatpush1.bf16.msra.mxu0 0
    %100 = vmatprep.subr.bf16.mxu0 0
    %101 = vmatpush1.bf16.msra.mxu0 0
    %102 = vmatprep.subr.bf16.mxu0 0
    %103 = vmatpush1.bf16.msra.mxu0 0
    %104 = vmatprep.subr.bf16.mxu0 0
    %105 = vmatpush1.bf16.msra.mxu0 0
    %106 = vmatprep.subr.bf16.mxu0 0
    %107 = vmatpush1.bf16.msra.mxu0 0
    %108 = vmatprep.mubr.bf16.mxu0 0
    %109 = vmatmul.mubr.bf16.gmra.mrb[0].mxu0 %v74
    %v110 = vpop.f32.mrb[0].mxu0
    %v111 = vadd.f32 %v64, %v110
    %v112 = vpop.f32.mrb[0].mxu0
    %v113 = vpop.f32.mrb[0].mxu0
    %v114 = vpop.f32.mrb[0].mxu0
    %115 = vdwg.mxu0
    %v116 = vmax.f32 %v111, 0.0
    %v117 = vpack.c.bf16 %v116, %v116
    %v118 = vld [vmem:[#allocation2] sm:$0xf]
    %v119 = vld [vmem:[#allocation2 + $0x4] sm:$0xf]
    %v120 = vld [vmem:[#allocation2 + $0x8] sm:$0xf]
    %v121 = vld [vmem:[#allocation2 + $0xc] sm:$0xf]
    %v122 = vld [vmem:[#allocation2 + $0x10] sm:$0xf]
    %v123 = vld [vmem:[#allocation2 + $0x14] sm:$0xf]
    %v124 = vld [vmem:[#allocation2 + $0x18] sm:$0xf]
    %v125 = vld [vmem:[#allocation2 + $0x1c] sm:$0xf]
    %v126 = vld [vmem:[#allocation2 + $0x20] sm:$0xf]
    %v127 = vld [vmem:[#allocation2 + $0x24] sm:$0xf]
    %v128 = vld [vmem:[#allocation2 + $0x28] sm:$0xf]
    %v129 = vld [vmem:[#allocation2 + $0x2c] sm:$0xf]
    %v130 = vld [vmem:[#allocation2 + $0x30] sm:$0xf]
    %v131 = vld [vmem:[#allocation2 + $0x34] sm:$0xf]
    %v132 = vld [vmem:[#allocation2 + $0x38] sm:$0xf]
    %v133 = vld [vmem:[#allocation2 + $0x3c] sm:$0xf]
    %v134 = vld [vmem:[%s4] sm:$0x1]
    %v136 = vlaneseq
    %v137 = vshrl.u32 %v136, 7
    %v138 = vsub.s32 0, %v137
    %v139 = vrot.slane %v134, %v138
    %v157 = vunpack.c.l.b16 %v118
    %v158 = vunpack.c.l.b16 %v119
    %v159 = vunpack.c.l.b16 %v120
    %v160 = vunpack.c.l.b16 %v121
    %v161 = vunpack.c.l.b16 %v122
    %v162 = vunpack.c.l.b16 %v123
    %v163 = vunpack.c.l.b16 %v124
    %v164 = vunpack.c.l.b16 %v125
    %v165 = vunpack.c.l.b16 %v126
    %v166 = vunpack.c.l.b16 %v127
    %v167 = vunpack.c.l.b16 %v128
    %v168 = vunpack.c.l.b16 %v129
    %v169 = vunpack.c.l.b16 %v130
    %v170 = vunpack.c.l.b16 %v131
    %v171 = vunpack.c.l.b16 %v132
    %v172 = vunpack.c.l.b16 %v133
    %v173 = vpack.c.b16 %v158, %v157
    %v174 = vpack.c.b16 %v160, %v159
    %v175 = vpack.c.b16 %v162, %v161
    %v176 = vpack.c.b16 %v164, %v163
    %v177 = vpack.c.b16 %v166, %v165
    %v178 = vpack.c.b16 %v168, %v167
    %v179 = vpack.c.b16 %v170, %v169
    %v180 = vpack.c.b16 %v172, %v171
    %189 = vmatprep.subr.bf16.mxu0 0
    %190 = vmatpush1.bf16.msra.mxu0 %v173
    %191 = vmatprep.subr.bf16.mxu0 0
    %192 = vmatpush1.bf16.msra.mxu0 %v174
    %193 = vmatprep.subr.bf16.mxu0 0
    %194 = vmatpush1.bf16.msra.mxu0 %v175
    %195 = vmatprep.subr.bf16.mxu0 0
    %196 = vmatpush1.bf16.msra.mxu0 %v176
    %197 = vmatprep.subr.bf16.mxu0 0
    %198 = vmatpush1.bf16.msra.mxu0 %v177
    %199 = vmatprep.subr.bf16.mxu0 0
    %200 = vmatpush1.bf16.msra.mxu0 %v178
    %201 = vmatprep.subr.bf16.mxu0 0
    %202 = vmatpush1.bf16.msra.mxu0 %v179
    %203 = vmatprep.subr.bf16.mxu0 0
    %204 = vmatpush1.bf16.msra.mxu0 %v180
    %205 = vmatprep.subr.bf16.mxu0 0
    %206 = vmatpush1.bf16.msra.mxu0 0
    %207 = vmatprep.subr.bf16.mxu0 0
    %208 = vmatpush1.bf16.msra.mxu0 0
    %209 = vmatprep.subr.bf16.mxu0 0
    %210 = vmatpush1.bf16.msra.mxu0 0
    %211 = vmatprep.subr.bf16.mxu0 0
    %212 = vmatpush1.bf16.msra.mxu0 0
    %213 = vmatprep.subr.bf16.mxu0 0
    %214 = vmatpush1.bf16.msra.mxu0 0
    %215 = vmatprep.subr.bf16.mxu0 0
    %216 = vmatpush1.bf16.msra.mxu0 0
    %217 = vmatprep.subr.bf16.mxu0 0
    %218 = vmatpush1.bf16.msra.mxu0 0
    %219 = vmatprep.subr.bf16.mxu0 0
    %220 = vmatpush1.bf16.msra.mxu0 0
    %221 = vmatprep.mubr.bf16.mxu0 0
    %222 = vmatmul.mubr.bf16.gmra.mrb[0].mxu0 %v117
    %v223 = vpop.f32.mrb[0].mxu0
    %v224 = vadd.f32 %v139, %v223
    %v225 = vpop.f32.mrb[0].mxu0
    %v226 = vpop.f32.mrb[0].mxu0
    %v227 = vpop.f32.mrb[0].mxu0
    %228 = vdwg.mxu0
    %v229 = vmax.f32 %v224, 0.0
    %v230 = vpack.c.bf16 %v229, %v229
    %v231 = vld [vmem:[#allocation5] sm:$0xf]
    %v232 = vld [vmem:[#allocation5 + $0x4] sm:$0xf]
    %v233 = vld [vmem:[#allocation5 + $0x8] sm:$0xf]
    %v234 = vld [vmem:[#allocation5 + $0xc] sm:$0xf]
    %v235 = vld [vmem:[#allocation5 + $0x10] sm:$0xf]
    %v236 = vld [vmem:[#allocation5 + $0x14] sm:$0xf]
    %v237 = vld [vmem:[#allocation5 + $0x18] sm:$0xf]
    %v238 = vld [vmem:[#allocation5 + $0x1c] sm:$0xf]
    %v239 = vld [vmem:[#allocation5 + $0x20] sm:$0xf]
    %v240 = vld [vmem:[#allocation5 + $0x24] sm:$0xf]
    %v241 = vld [vmem:[#allocation5 + $0x28] sm:$0xf]
    %v242 = vld [vmem:[#allocation5 + $0x2c] sm:$0xf]
    %v243 = vld [vmem:[#allocation5 + $0x30] sm:$0xf]
    %v244 = vld [vmem:[#allocation5 + $0x34] sm:$0xf]
    %v245 = vld [vmem:[#allocation5 + $0x38] sm:$0xf]
    %v246 = vld [vmem:[#allocation5 + $0x3c] sm:$0xf]
    %v247 = vld [vmem:[%s6] sm:$0x1]
    %v249 = vlaneseq
    %v250 = vshrl.u32 %v249, 7
    %v251 = vsub.s32 0, %v250
    %v252 = vrot.slane %v247, %v251
    %v270 = vunpack.c.l.b16 %v231
    %v271 = vunpack.c.l.b16 %v232
    %v272 = vunpack.c.l.b16 %v233
    %v273 = vunpack.c.l.b16 %v234
    %v274 = vunpack.c.l.b16 %v235
    %v275 = vunpack.c.l.b16 %v236
    %v276 = vunpack.c.l.b16 %v237
    %v277 = vunpack.c.l.b16 %v238
    %v278 = vunpack.c.l.b16 %v239
    %v279 = vunpack.c.l.b16 %v240
    %v280 = vunpack.c.l.b16 %v241
    %v281 = vunpack.c.l.b16 %v242
    %v282 = vunpack.c.l.b16 %v243
    %v283 = vunpack.c.l.b16 %v244
    %v284 = vunpack.c.l.b16 %v245
    %v285 = vunpack.c.l.b16 %v246
    %v286 = vpack.c.b16 %v271, %v270
    %v287 = vpack.c.b16 %v273, %v272
    %v288 = vpack.c.b16 %v275, %v274
    %v289 = vpack.c.b16 %v277, %v276
    %v290 = vpack.c.b16 %v279, %v278
    %v291 = vpack.c.b16 %v281, %v280
    %v292 = vpack.c.b16 %v283, %v282
    %v293 = vpack.c.b16 %v285, %v284
    %302 = vmatprep.subr.bf16.mxu0 0
    %303 = vmatpush1.bf16.msra.mxu0 %v286
    %304 = vmatprep.subr.bf16.mxu0 0
    %305 = vmatpush1.bf16.msra.mxu0 %v287
    %306 = vmatprep.subr.bf16.mxu0 0
    %307 = vmatpush1.bf16.msra.mxu0 %v288
    %308 = vmatprep.subr.bf16.mxu0 0
    %309 = vmatpush1.bf16.msra.mxu0 %v289
    %310 = vmatprep.subr.bf16.mxu0 0
    %311 = vmatpush1.bf16.msra.mxu0 %v290
    %312 = vmatprep.subr.bf16.mxu0 0
    %313 = vmatpush1.bf16.msra.mxu0 %v291
    %314 = vmatprep.subr.bf16.mxu0 0
    %315 = vmatpush1.bf16.msra.mxu0 %v292
    %316 = vmatprep.subr.bf16.mxu0 0
    %317 = vmatpush1.bf16.msra.mxu0 %v293
    %318 = vmatprep.subr.bf16.mxu0 0
    %319 = vmatpush1.bf16.msra.mxu0 0
    %320 = vmatprep.subr.bf16.mxu0 0
    %321 = vmatpush1.bf16.msra.mxu0 0
    %322 = vmatprep.subr.bf16.mxu0 0
    %323 = vmatpush1.bf16.msra.mxu0 0
    %324 = vmatprep.subr.bf16.mxu0 0
    %325 = vmatpush1.bf16.msra.mxu0 0
    %326 = vmatprep.subr.bf16.mxu0 0
    %327 = vmatpush1.bf16.msra.mxu0 0
    %328 = vmatprep.subr.bf16.mxu0 0
    %329 = vmatpush1.bf16.msra.mxu0 0
    %330 = vmatprep.subr.bf16.mxu0 0
    %331 = vmatpush1.bf16.msra.mxu0 0
    %332 = vmatprep.subr.bf16.mxu0 0
    %333 = vmatpush1.bf16.msra.mxu0 0
    %334 = vmatprep.mubr.bf16.mxu0 0
    %335 = vmatmul.mubr.bf16.gmra.mrb[0].mxu0 %v230
    %v336 = vpop.f32.mrb[0].mxu0
    %v337 = vadd.f32 %v252, %v336
    %v338 = vpop.f32.mrb[0].mxu0
    %v339 = vpop.f32.mrb[0].mxu0
    %v340 = vpop.f32.mrb[0].mxu0
    %341 = vdwg.mxu0
    %342 = vmax.xlane.f32.xlu0 %v337
    %v343 = vpop.xlane.xlu0 %342
    %v344 = vsub.f32 %v337, %v343
    %v345 = vmul.f32 %v344, 1.442695
    %v346 = vpow.pop %v345
    %347 = vadd.xlane.f32.xlu0 %v346
    %v348 = vpop.xlane.xlu0 %347
    %v349 = vrcp.pop %v348
    %v350 = vmul.f32 %v346, %v349
    %351 = vst [vmem:[#allocation7] sm:$0xff] %v350
    // Predicated region
    $region38: #{forward.1} parent=1 // pred_check
      _
    $region39: #{forward.1} parent=1 // pred_check_branch
      %353 = sbr.rel (0) target = $region41
    $region40: #{forward.1} parent=1 // pred_region
      %s355 = ssub.s32 128, 128
      %356 = vsyncadd [#allocation4], %s355
      %s358 = sshll.u32 [#allocation7], 4
      %s359 = int_to_ptr.vmem [resolvable:$true] %s358
      %361 = dma.vmem_to_hbm [thread:$0]  %s359, 128, %s7, [#allocation4]
    $region41: #{forward.1} parent=1 // pred_fallthru
      _
    // Predicated region
    $region42: #{forward.1} parent=1 // pred_check
      _
    $region43: #{forward.1} parent=1 // pred_check_branch
      %363 = sbr.rel (0) target = $region45
    $region44: #{forward.1} parent=1 // pred_region
      %364 = dma.done [#allocation4], 128
    $region45: #{forward.1} parent=1 // pred_fallthru
      _
    %365 = vsyncpa [#allocation3], 1
    %366 = vsyncpa [#allocation6], 1
    %367 = vsyncpa [#allocation4], 1

</llo_original>
